<compile_context>
chip_gen: v7x
topology: tpu7x:2x2x1
jax: 0.10.0
libtpu: 0.0.40
codegen_flags: <defaults>
</compile_context>

<pallas_src>
import functools

import jax
import jax.numpy as jnp
from jax import lax
from jax.experimental import pallas as pl
from jax.experimental.pallas import tpu as pltpu


def _round_up(x, m):
    return (x + m - 1) // m * m


def _pick_row_tile(h, w, target):
    """Largest divisor of h that is <= target and keeps (tile_h * w) % 8 == 0."""
    for cand in range(min(target, h), 0, -1):
        if h % cand == 0 and (cand * w) % 8 == 0:
            return cand
    return h


def _conv_im2col_kernel(x_ref, w_ref, b_ref, y_ref, stats_ref, *,
                        tile_h, out_w, k_h, k_w, mxu_dtype):
    """One (batch, row-tile) grid step: conv + bias for tile_h output rows.

    x_ref:     (1, Hp, Wp, Cin_p)   full padded image of this batch element (f32)
    w_ref:     (KH*KW*Cin_p, Cp)    im2col-ordered weights (bf16)
    b_ref:     (1, Cp)              conv bias (f32)
    y_ref:     (tile_h*W, Cp)       conv output rows (f32, lane-dense)
    stats_ref: (1, 8, Cp)           row0 = per-tile sum, row1 = per-tile sum_sq
    """
    cp = y_ref.shape[-1]
    tile_rows = tile_h * out_w
    h0 = pl.multiple_of(pl.program_id(1) * tile_h, tile_h)

    # Gather the KH*KW shifted taps via ref slices (static W slice, dynamic
    # row slice) and build the im2col patch on the tile.
    taps = []
    for kh in range(k_h):
        for kw in range(k_w):
            taps.append(x_ref[0, pl.ds(h0 + kh, tile_h), kw:kw + out_w, :])
    patch = jnp.concatenate(taps, axis=-1)            # (tile_h, W, KH*KW*Cin_p)
    patch = patch.reshape(tile_rows, patch.shape[-1]).astype(mxu_dtype)

    # Single MXU contraction with f32 accumulation.
    acc = jnp.dot(patch, w_ref[...], preferred_element_type=jnp.float32)
    acc = acc + b_ref[...]
    y_ref[...] = acc

    # Single-pass per-tile BN statistics (sum and sum of squares).
    s1 = jnp.sum(acc, axis=0, keepdims=True)
    s2 = jnp.sum(acc * acc, axis=0, keepdims=True)
    stats_ref[0] = jnp.concatenate(
        [s1, s2, jnp.zeros((6, cp), jnp.float32)], axis=0)


def _bn_act_kernel(y_ref, scale_ref, shift_ref, o_ref, *, use_activation, slope):
    """Elementwise y * scale + shift, then LeakyReLU(slope). Lane-dense blocks."""
    y = y_ref[...] * scale_ref[...] + shift_ref[...]
    if use_activation:
        y = jnp.where(y >= 0, y, slope * y)
    o_ref[...] = y


def conv_block(x_nchw, w_oihw, bias, gamma, beta, *,
               stride=1, padding=1, eps=1e-5, negative_slope=0.2,
               use_activation=True, use_batchnorm=True,
               mxu_dtype=jnp.bfloat16, row_tile=8):
    """NCHW in / NCHW out; matches PyTorch ConvBlock forward (training-mode BN)."""
    if stride != 1:
        raise NotImplementedError("conv_block: only stride=1 is supported")
        # TODO(synk): general stride / dilation support.

    N, Cin, Hin, Win = x_nchw.shape
    Cout, _, KH, KW = w_oihw.shape
    H = Hin + 2 * padding - KH + 1
    W = Win + 2 * padding - KW + 1
    Hp, Wp = H + KH - 1, W + KW - 1

    Cin_p = _round_up(Cin, 8)       # pad contraction minor dim
    Cp = _round_up(Cout, 128)       # lane-dense output channels

    # ---- layout & padding at the boundary ----
    x = jnp.transpose(x_nchw, (0, 2, 3, 1)).astype(jnp.float32)        # NHWC
    x = jnp.pad(x, ((0, 0), (padding, padding), (padding, padding),
                    (0, Cin_p - Cin)))

    w = jnp.transpose(w_oihw, (2, 3, 1, 0)).astype(jnp.float32)        # HWIO
    w = jnp.pad(w, ((0, 0), (0, 0), (0, Cin_p - Cin), (0, Cp - Cout)))
    w2d = w.reshape(KH * KW * Cin_p, Cp).astype(mxu_dtype)             # bf16 once

    b_p = jnp.pad(bias.astype(jnp.float32), (0, Cp - Cout)).reshape(1, Cp)
    gamma_p = jnp.pad(gamma.astype(jnp.float32), (0, Cp - Cout),
                      constant_values=1.0).reshape(1, Cp)
    beta_p = jnp.pad(beta.astype(jnp.float32), (0, Cp - Cout)).reshape(1, Cp)

    TH = _pick_row_tile(H, W, row_tile)
    Ht = H // TH
    R = N * H * W
    tile_rows = TH * W

    # ---- pass 1: conv + bias + per-tile BN stats ----
    conv_kernel = functools.partial(
        _conv_im2col_kernel, tile_h=TH, out_w=W, k_h=KH, k_w=KW,
        mxu_dtype=mxu_dtype)

    flops = 2 * N * H * W * KH * KW * Cin * Cout
    bytes_accessed = (N * Hp * Wp * Cin_p * 4
                      + KH * KW * Cin_p * Cp * jnp.dtype(mxu_dtype).itemsize
                      + R * Cp * 4 + N * Ht * 8 * Cp * 4)

    y2d, stats = pl.pallas_call(
        conv_kernel,
        grid=(N, Ht),
        in_specs=[
            pl.BlockSpec((1, Hp, Wp, Cin_p), lambda n, ht: (n, 0, 0, 0)),
            pl.BlockSpec((KH * KW * Cin_p, Cp), lambda n, ht: (0, 0)),
            pl.BlockSpec((1, Cp), lambda n, ht: (0, 0)),
        ],
        out_specs=(
            pl.BlockSpec((tile_rows, Cp), lambda n, ht: (n * Ht + ht, 0)),
            pl.BlockSpec((1, 8, Cp), lambda n, ht: (n * Ht + ht, 0, 0)),
        ),
        out_shape=(
            jax.ShapeDtypeStruct((R, Cp), jnp.float32),
            jax.ShapeDtypeStruct((N * Ht, 8, Cp), jnp.float32),
        ),
        compiler_params=pltpu.CompilerParams(
            dimension_semantics=("parallel", "parallel"),
            vmem_limit_bytes=32 * 1024 * 1024),
        cost_estimate=pl.CostEstimate(flops=flops, transcendentals=0,
                                      bytes_accessed=bytes_accessed),
    )(x, w2d, b_p)

    # ---- reduce per-tile stats -> global batch statistics (training-mode BN) ----
    if use_batchnorm:
        count = float(N * H * W)
        s1 = jnp.sum(stats[:, 0, :], axis=0)
        s2 = jnp.sum(stats[:, 1, :], axis=0)
        mean = s1 / count
        var = jnp.maximum(s2 / count - mean * mean, 0.0)   # biased variance
        scale = (gamma_p[0] * lax.rsqrt(var + eps)).reshape(1, Cp)
        shift = (beta_p[0] - mean * scale[0]).reshape(1, Cp)
    else:
        scale = jnp.ones((1, Cp), jnp.float32)
        shift = jnp.zeros((1, Cp), jnp.float32)

    # ---- pass 2: normalize + LeakyReLU (elementwise, lane-dense) ----
    if use_batchnorm or use_activation:
        TR = tile_rows
        bn_kernel = functools.partial(
            _bn_act_kernel, use_activation=use_activation, slope=negative_slope)
        y2d = pl.pallas_call(
            bn_kernel,
            grid=(R // TR,),
            in_specs=[
                pl.BlockSpec((TR, Cp), lambda i: (i, 0)),
                pl.BlockSpec((1, Cp), lambda i: (0, 0)),
                pl.BlockSpec((1, Cp), lambda i: (0, 0)),
            ],
            out_specs=pl.BlockSpec((TR, Cp), lambda i: (i, 0)),
            out_shape=jax.ShapeDtypeStruct((R, Cp), jnp.float32),
            compiler_params=pltpu.CompilerParams(
                dimension_semantics=("parallel",),
                vmem_limit_bytes=32 * 1024 * 1024),
            cost_estimate=pl.CostEstimate(flops=3 * R * Cp, transcendentals=0,
                                          bytes_accessed=2 * R * Cp * 4),
        )(y2d, scale, shift)

    out = y2d[:, :Cout].reshape(N, H, W, Cout)
    return jnp.transpose(out, (0, 3, 1, 2))                 # NCHW


def _reference(x_nchw, w_oihw, bias, gamma, beta, *, padding=1, eps=1e-5,
               slope=0.2):
    """Pure-JAX reference mirroring torch Conv2d + BatchNorm2d(train) + LeakyReLU."""
    y = lax.conv_general_dilated(
        x_nchw, w_oihw, window_strides=(1, 1),
        padding=((padding, padding), (padding, padding)),
        dimension_numbers=("NCHW", "OIHW", "NCHW"))
    y = y + bias[None, :, None, None]
    mean = y.mean(axis=(0, 2, 3), keepdims=True)
    var = ((y - mean) ** 2).mean(axis=(0, 2, 3), keepdims=True)
    y = (y - mean) * lax.rsqrt(var + eps)
    y = y * gamma[None, :, None, None] + beta[None, :, None, None]
    return jnp.where(y >= 0, y, slope * y)


if __name__ == "__main__":
    # ConvBlock(in_channels=4, out_channels=8, kernel_size=3, stride=1, padding=1)
    N, Cin, Hin, Win = 2, 4, 16, 16
    Cout, KH, KW = 8, 3, 3

    key = jax.random.PRNGKey(0)
    kx, kw_, kb = jax.random.split(key, 3)
    x = jax.random.normal(kx, (N, Cin, Hin, Win), dtype=jnp.float32)
    w = jax.random.normal(kw_, (Cout, Cin, KH, KW), dtype=jnp.float32) * 0.1
    b = jax.random.normal(kb, (Cout,), dtype=jnp.float32) * 0.1
    gamma = jnp.ones((Cout,), jnp.float32)   # BatchNorm2d default weight
    beta = jnp.zeros((Cout,), jnp.float32)   # BatchNorm2d default bias

    out = conv_block(x, w, b, gamma, beta, padding=1,
                     use_activation=True, use_batchnorm=True)
    jax.block_until_ready(out)

    ref = _reference(x, w, b, gamma, beta, padding=1)
    assert out.shape == (N, Cout, Hin, Win)
    # bf16 MXU operands with f32 accumulation -> slightly looser tolerance.
    assert jnp.allclose(out, ref, rtol=2e-2, atol=2e-2), \
        float(jnp.max(jnp.abs(out - ref)))

    print("KERNEL_OK")
</pallas_src>

<mosaic_0001>
module attributes {stable_mosaic.version = 11 : i64} {
  func.func @_conv_im2col_kernel(%arg0: i32, %arg1: i32, %arg2: memref<1x18x18x8xf32, #tpu.memory_space<vmem>>, %arg3: memref<72x128xbf16, #tpu.memory_space<vmem>>, %arg4: memref<1x128xf32, #tpu.memory_space<vmem>>, %arg5: memref<128x128xf32, #tpu.memory_space<vmem>>, %arg6: memref<1x8x128xf32, #tpu.memory_space<vmem>>) attributes {dimension_semantics = [#tpu.dimension_semantics<parallel>, #tpu.dimension_semantics<parallel>], iteration_bounds = array<i64: 2, 2>, scalar_prefetch = 0 : i64, scratch_operands = 0 : i64, tpu.core_type = #tpu.core_type<tc>, window_params = [{transform_indices = @transform_0, window_bounds = array<i64: 1, 18, 18, 8>}, {pipeline_mode = #tpu.pipeline_mode<synchronous>, transform_indices = @transform_1, window_bounds = array<i64: 72, 128>}, {pipeline_mode = #tpu.pipeline_mode<synchronous>, transform_indices = @transform_2, window_bounds = array<i64: 1, 128>}, {transform_indices = @transform_3, window_bounds = array<i64: 128, 128>}, {transform_indices = @transform_4, window_bounds = array<i64: 1, 8, 128>}]} {
    %c8_i32 = arith.constant 8 : i32
    %0 = arith.muli %arg1, %c8_i32 : i32
    %1 = tpu.assume_multiple %0, 8 : i32
    %c0_i32 = arith.constant 0 : i32
    %2 = arith.addi %1, %c0_i32 : i32
    %c0 = arith.constant 0 : index
    %3 = arith.index_cast %2 : i32 to index
    %c0_0 = arith.constant 0 : index
    %c0_1 = arith.constant 0 : index
    %4 = vector.load %arg2[%c0, %3, %c0_0, %c0_1] : memref<1x18x18x8xf32, #tpu.memory_space<vmem>>, vector<1x8x16x8xf32>
    %5 = vector.shape_cast %4 : vector<1x8x16x8xf32> to vector<8x16x8xf32>
    %c0_i32_2 = arith.constant 0 : i32
    %6 = arith.addi %1, %c0_i32_2 : i32
    %c0_3 = arith.constant 0 : index
    %7 = arith.index_cast %6 : i32 to index
    %c1 = arith.constant 1 : index
    %c0_4 = arith.constant 0 : index
    %8 = vector.load %arg2[%c0_3, %7, %c1, %c0_4] : memref<1x18x18x8xf32, #tpu.memory_space<vmem>>, vector<1x8x16x8xf32>
    %9 = vector.shape_cast %8 : vector<1x8x16x8xf32> to vector<8x16x8xf32>
    %c0_i32_5 = arith.constant 0 : i32
    %10 = arith.addi %1, %c0_i32_5 : i32
    %c0_6 = arith.constant 0 : index
    %11 = arith.index_cast %10 : i32 to index
    %c2 = arith.constant 2 : index
    %c0_7 = arith.constant 0 : index
    %12 = vector.load %arg2[%c0_6, %11, %c2, %c0_7] : memref<1x18x18x8xf32, #tpu.memory_space<vmem>>, vector<1x8x16x8xf32>
    %13 = vector.shape_cast %12 : vector<1x8x16x8xf32> to vector<8x16x8xf32>
    %c1_i32 = arith.constant 1 : i32
    %14 = arith.addi %1, %c1_i32 : i32
    %c0_8 = arith.constant 0 : index
    %15 = arith.index_cast %14 : i32 to index
    %c0_9 = arith.constant 0 : index
    %c0_10 = arith.constant 0 : index
    %16 = vector.load %arg2[%c0_8, %15, %c0_9, %c0_10] : memref<1x18x18x8xf32, #tpu.memory_space<vmem>>, vector<1x8x16x8xf32>
    %17 = vector.shape_cast %16 : vector<1x8x16x8xf32> to vector<8x16x8xf32>
    %c1_i32_11 = arith.constant 1 : i32
    %18 = arith.addi %1, %c1_i32_11 : i32
    %c0_12 = arith.constant 0 : index
    %19 = arith.index_cast %18 : i32 to index
    %c1_13 = arith.constant 1 : index
    %c0_14 = arith.constant 0 : index
    %20 = vector.load %arg2[%c0_12, %19, %c1_13, %c0_14] : memref<1x18x18x8xf32, #tpu.memory_space<vmem>>, vector<1x8x16x8xf32>
    %21 = vector.shape_cast %20 : vector<1x8x16x8xf32> to vector<8x16x8xf32>
    %c1_i32_15 = arith.constant 1 : i32
    %22 = arith.addi %1, %c1_i32_15 : i32
    %c0_16 = arith.constant 0 : index
    %23 = arith.index_cast %22 : i32 to index
    %c2_17 = arith.constant 2 : index
    %c0_18 = arith.constant 0 : index
    %24 = vector.load %arg2[%c0_16, %23, %c2_17, %c0_18] : memref<1x18x18x8xf32, #tpu.memory_space<vmem>>, vector<1x8x16x8xf32>
    %25 = vector.shape_cast %24 : vector<1x8x16x8xf32> to vector<8x16x8xf32>
    %c2_i32 = arith.constant 2 : i32
    %26 = arith.addi %1, %c2_i32 : i32
    %c0_19 = arith.constant 0 : index
    %27 = arith.index_cast %26 : i32 to index
    %c0_20 = arith.constant 0 : index
    %c0_21 = arith.constant 0 : index
    %28 = vector.load %arg2[%c0_19, %27, %c0_20, %c0_21] : memref<1x18x18x8xf32, #tpu.memory_space<vmem>>, vector<1x8x16x8xf32>
    %29 = vector.shape_cast %28 : vector<1x8x16x8xf32> to vector<8x16x8xf32>
    %c2_i32_22 = arith.constant 2 : i32
    %30 = arith.addi %1, %c2_i32_22 : i32
    %c0_23 = arith.constant 0 : index
    %31 = arith.index_cast %30 : i32 to index
    %c1_24 = arith.constant 1 : index
    %c0_25 = arith.constant 0 : index
    %32 = vector.load %arg2[%c0_23, %31, %c1_24, %c0_25] : memref<1x18x18x8xf32, #tpu.memory_space<vmem>>, vector<1x8x16x8xf32>
    %33 = vector.shape_cast %32 : vector<1x8x16x8xf32> to vector<8x16x8xf32>
    %c2_i32_26 = arith.constant 2 : i32
    %34 = arith.addi %1, %c2_i32_26 : i32
    %c0_27 = arith.constant 0 : index
    %35 = arith.index_cast %34 : i32 to index
    %c2_28 = arith.constant 2 : index
    %c0_29 = arith.constant 0 : index
    %36 = vector.load %arg2[%c0_27, %35, %c2_28, %c0_29] : memref<1x18x18x8xf32, #tpu.memory_space<vmem>>, vector<1x8x16x8xf32>
    %37 = vector.shape_cast %36 : vector<1x8x16x8xf32> to vector<8x16x8xf32>
    %38 = tpu.concatenate %5, %9, %13, %17, %21, %25, %29, %33, %37 in 2 : vector<8x16x8xf32>, vector<8x16x8xf32>, vector<8x16x8xf32>, vector<8x16x8xf32>, vector<8x16x8xf32>, vector<8x16x8xf32>, vector<8x16x8xf32>, vector<8x16x8xf32>, vector<8x16x8xf32> -> vector<8x16x72xf32>
    %39 = vector.shape_cast %38 : vector<8x16x72xf32> to vector<128x72xf32>
    %40 = arith.truncf %39 : vector<128x72xf32> to vector<128x72xbf16>
    %c0_30 = arith.constant 0 : index
    %c0_31 = arith.constant 0 : index
    %41 = vector.load %arg3[%c0_30, %c0_31] : memref<72x128xbf16, #tpu.memory_space<vmem>>, vector<72x128xbf16>
    %cst = arith.constant dense<0.000000e+00> : vector<128x128xf32>
    %42 = tpu.matmul %40, %41, %cst {dimension_numbers = #tpu.dot_dimension_numbers<[1], [0], [0], [1], [0, 0, 1, 1], [], []>} : vector<128x72xbf16>, vector<72x128xbf16>, vector<128x128xf32> -> vector<128x128xf32>
    %c0_32 = arith.constant 0 : index
    %c0_33 = arith.constant 0 : index
    %43 = vector.load %arg4[%c0_32, %c0_33] : memref<1x128xf32, #tpu.memory_space<vmem>>, vector<1x128xf32>
    %44 = vector.broadcast %43 : vector<1x128xf32> to vector<128x128xf32>
    %45 = arith.addf %42, %44 : vector<128x128xf32>
    %c0_34 = arith.constant 0 : index
    %c0_35 = arith.constant 0 : index
    %46 = vector.load %arg5[%c0_34, %c0_35] : memref<128x128xf32, #tpu.memory_space<vmem>>, vector<128x128xf32>
    tpu.vector_store %arg5[%c0_34, %c0_35], %45 {strides = array<i32>} : memref<128x128xf32, #tpu.memory_space<vmem>>, vector<128x128xf32>,
    %cst_36 = arith.constant dense<0.000000e+00> : vector<128xf32>
    %47 = vector.multi_reduction <add>, %45, %cst_36 [0] : vector<128x128xf32> to vector<128xf32>
    %48 = vector.shape_cast %47 : vector<128xf32> to vector<1x128xf32>
    %49 = arith.mulf %45, %45 : vector<128x128xf32>
    %cst_37 = arith.constant dense<0.000000e+00> : vector<128xf32>
    %50 = vector.multi_reduction <add>, %49, %cst_37 [0] : vector<128x128xf32> to vector<128xf32>
    %51 = vector.shape_cast %50 : vector<128xf32> to vector<1x128xf32>
    %cst_38 = arith.constant 0.000000e+00 : f32
    %52 = vector.broadcast %cst_38 : f32 to vector<6x128xf32>
    %53 = tpu.concatenate %48, %51, %52 in 0 : vector<1x128xf32>, vector<1x128xf32>, vector<6x128xf32> -> vector<8x128xf32>
    %c0_39 = arith.constant 0 : index
    %c0_40 = arith.constant 0 : index
    %c0_41 = arith.constant 0 : index
    %54 = vector.load %arg6[%c0_39, %c0_40, %c0_41] : memref<1x8x128xf32, #tpu.memory_space<vmem>>, vector<1x8x128xf32>
    %55 = vector.shape_cast %54 : vector<1x8x128xf32> to vector<8x128xf32>
    %56 = vector.shape_cast %53 : vector<8x128xf32> to vector<1x8x128xf32>
    tpu.vector_store %arg6[%c0_39, %c0_40, %c0_41], %56 {strides = array<i32>} : memref<1x8x128xf32, #tpu.memory_space<vmem>>, vector<1x8x128xf32>,
    return
  }
  func.func @transform_0(%arg0: i32, %arg1: i32) -> (i32, i32, i32, i32) {
    %c0_i32 = arith.constant 0 : i32
    %c0_i32_0 = arith.constant 0 : i32
    %c0_i32_1 = arith.constant 0 : i32
    %c0_i32_2 = arith.constant 0 : i32
    return %arg0, %c0_i32, %c0_i32_0, %c0_i32_1 : i32, i32, i32, i32
  }
  func.func @transform_1(%arg0: i32, %arg1: i32) -> (i32, i32) {
    %c0_i32 = arith.constant 0 : i32
    %c0_i32_0 = arith.constant 0 : i32
    %c0_i32_1 = arith.constant 0 : i32
    return %c0_i32, %c0_i32_0 : i32, i32
  }
  func.func @transform_2(%arg0: i32, %arg1: i32) -> (i32, i32) {
    %c0_i32 = arith.constant 0 : i32
    %c0_i32_0 = arith.constant 0 : i32
    %c0_i32_1 = arith.constant 0 : i32
    return %c0_i32, %c0_i32_0 : i32, i32
  }
  func.func @transform_3(%arg0: i32, %arg1: i32) -> (i32, i32) {
    %c2_i32 = arith.constant 2 : i32
    %0 = arith.muli %arg0, %c2_i32 : i32
    %1 = arith.addi %0, %arg1 : i32
    %c0_i32 = arith.constant 0 : i32
    %c0_i32_0 = arith.constant 0 : i32
    return %1, %c0_i32 : i32, i32
  }
  func.func @transform_4(%arg0: i32, %arg1: i32) -> (i32, i32, i32) {
    %c2_i32 = arith.constant 2 : i32
    %0 = arith.muli %arg0, %c2_i32 : i32
    %1 = arith.addi %0, %arg1 : i32
    %c0_i32 = arith.constant 0 : i32
    %c0_i32_0 = arith.constant 0 : i32
    %c0_i32_1 = arith.constant 0 : i32
    return %1, %c0_i32, %c0_i32_0 : i32, i32, i32
  }
}

</mosaic_0001>

<llo_original>
// kernel: tpu_custom_call.1
$region0: #{tpu_custom_call.1}
  #allocation0 [shape = 'u32[]', space=smem, size = 0x4, offset = 0x4, fixed_abs, tag = 'smem constant byte address 0x4 - core index']
  #allocation1 [shape = 'u32[144,128]{1,0:T(1,128)}', space=vmem, size = 0x12000, scoped, tag = 'internal scratch']
  %s0 = inlined_call_operand.vmem [shape: f32[2,18,18,8], index: 0, kind: input, shape index: {}]
  %s1 = inlined_call_operand.vmem [shape: bf16[72,128], index: 1, kind: input, shape index: {}]
  %s2 = inlined_call_operand.vmem [shape: f32[1,128], index: 2, kind: input, shape index: {}]
  %s3 = inlined_call_operand.hbm [shape: f32[512,128], index: 3, kind: output, shape index: {0}]
  %s4 = inlined_call_operand.hbm [shape: f32[4,8,128], index: 4, kind: output, shape index: {1}]
  %5 = xla_tuple %s3, %s4
  %s6 = sld [smem:[#allocation0]]
  $region53: #{tpu_custom_call.1} parent=0
    _
  %s8 = ssub.s32 1, %s6
  %s9 = scalar_select 0, %s8, %s6
  $region1: #{tpu_custom_call.1} parent=0
    #allocation2 [shape = 'u8[131072]{0}', space=vmem, size = 0x20000, scoped, tag = 'output window, operand 0']
    #allocation3 [shape = 's32[2]{0}', space=sflag, size = 0x8, scoped, tag = 'scoped memory for tpu_custom_call.1']
    #allocation4 [shape = 'u8[8192]{0}', space=vmem, size = 0x2000, scoped, tag = 'output window, operand 1']
    #allocation5 [shape = 's32[2]{0}', space=sflag, size = 0x8, scoped, tag = 'scoped memory for tpu_custom_call.1']
    %10 = vsyncpa [#allocation3], 0
    %s11 = scalar_lea.sflag [#allocation3], 1
    %12 = vsyncpa %s11, 0
    %13 = vsyncpa [#allocation5], 0
    %s14 = scalar_lea.sflag [#allocation5], 1
    %15 = vsyncpa %s14, 0
    loop: start=0, step=1, limit=6
    $region2: #{tpu_custom_call.1} parent=1 // loop_pre_header
      _
    $region3: #{tpu_custom_call.1} parent=1 // loop_header
      %s17 = sphi 0, %s21
      %p18 = scmp.ge.s32.totalorder %s17, 6
      %s24 = sphi 0, %s36
      %s25 = sphi 0, %s32
      %s26 = sphi 0, %s24
      %s27 = sphi 0, %s25
      %s28 = sphi 0, %s26
      %s29 = sphi 0, %s27
      %s39 = sphi 0, %s41
      %s42 = sphi 0, %s39
      %s43 = sphi 0, %s42
      %s59 = sphi 0, %s43
      %s63 = sphi 0, %s63
      %s65 = sphi 0, %s63
      %s66 = sphi 0, %s65
      %s80 = sphi 0, %s66
      %s84 = sphi 0, %s84
      %s86 = sphi 0, %s84
      %s87 = sphi 0, %s86
      %s101 = sphi 0, %s87
      %s111 = sphi 0, %s113
      %s114 = sphi 0, %s111
      %s115 = sphi 0, %s114
      %s131 = sphi 0, %s115
      %s141 = sphi 0, %s143
      %s144 = sphi 0, %s141
      %s145 = sphi 0, %s144
      %s161 = sphi 0, %s145
    $region4: #{tpu_custom_call.1} parent=1 // loop_header_branch
      %20 = sbr.rel (%p18) target = $region8
    $region5: #{tpu_custom_call.1} parent=1 // loop_body
      %s22 = ssub.s32 %s17, 1
      %s23 = ssub.s32 %s17, 2
      %s30 = sadd.s32 1, %s25
      %p31 = scmp.ge.s32.totalorder %s30, 2
      %s32 = scalar_select %p31, 0, %s30
      %s33 = sadd.s32 1, %s24
      %s34 = scalar_select %p31, %s33, %s24
      %p35 = scmp.ge.s32.totalorder %s34, 2
      %s36 = scalar_select %p35, 0, %s34
      %s37 = ssub.s32 %s24, %s36
      %p38 = scmp.eq.s32.totalorder %s37, 0
      %s40 = sadd.s32 %s39, 1
      %s41 = scalar_select %p38, %s39, %s40
      %p44 = pneg %p38
      %p45 = scmp.eq.s32.totalorder %s17, 3
      %p46 = por %p44, %p45
      %p47 = scmp.ne.s32.totalorder %s39, %s42
      %p48 = scmp.eq.s32.totalorder %s17, 0
      %p49 = por %p47, %p48
      %p50 = scmp.ne.s32.totalorder %s39, %s42
      %p51 = scmp.eq.s32.totalorder %s22, 3
      %p52 = por %p50, %p51
      %p53 = scmp.ne.s32.totalorder %s42, %s43
      %p54 = scmp.eq.s32.totalorder %s22, 0
      %p55 = por %p53, %p54
      %p56 = scmp.ne.s32.totalorder %s42, %s43
      %p57 = scmp.eq.s32.totalorder %s23, 3
      %p58 = por %p56, %p57
      %p60 = scmp.ne.s32.totalorder %s43, %s59
      %p61 = scmp.eq.s32.totalorder %s23, 0
      %p62 = por %p60, %p61
      %s64 = sadd.s32 %s63, 1
      %p67 = scmp.eq.s32.totalorder %s17, 3
      %p68 = scmp.ne.s32.totalorder %s63, %s65
      %p69 = scmp.eq.s32.totalorder %s17, 0
      %p70 = por %p68, %p69
      %p71 = scmp.ne.s32.totalorder %s63, %s65
      %p72 = scmp.eq.s32.totalorder %s22, 3
      %p73 = por %p71, %p72
      %p74 = scmp.ne.s32.totalorder %s65, %s66
      %p75 = scmp.eq.s32.totalorder %s22, 0
      %p76 = por %p74, %p75
      %p77 = scmp.ne.s32.totalorder %s65, %s66
      %p78 = scmp.eq.s32.totalorder %s23, 3
      %p79 = por %p77, %p78
      %p81 = scmp.ne.s32.totalorder %s66, %s80
      %p82 = scmp.eq.s32.totalorder %s23, 0
      %p83 = por %p81, %p82
      %s85 = sadd.s32 %s84, 1
      %p88 = scmp.eq.s32.totalorder %s17, 3
      %p89 = scmp.ne.s32.totalorder %s84, %s86
      %p90 = scmp.eq.s32.totalorder %s17, 0
      %p91 = por %p89, %p90
      %p92 = scmp.ne.s32.totalorder %s84, %s86
      %p93 = scmp.eq.s32.totalorder %s22, 3
      %p94 = por %p92, %p93
      %p95 = scmp.ne.s32.totalorder %s86, %s87
      %p96 = scmp.eq.s32.totalorder %s22, 0
      %p97 = por %p95, %p96
      %p98 = scmp.ne.s32.totalorder %s86, %s87
      %p99 = scmp.eq.s32.totalorder %s23, 3
      %p100 = por %p98, %p99
      %p102 = scmp.ne.s32.totalorder %s87, %s101
      %p103 = scmp.eq.s32.totalorder %s23, 0
      %p104 = por %p102, %p103
      %s105 = smul.u32 %s24, 2
      %s106 = sadd.s32 %s105, %s25
      %s107 = smul.u32 %s36, 2
      %s108 = sadd.s32 %s107, %s32
      %s109 = ssub.s32 %s106, %s108
      %p110 = scmp.eq.s32.totalorder %s109, 0
      %s112 = sadd.s32 %s111, 1
      %s113 = scalar_select %p110, %s111, %s112
      %p116 = pneg %p110
      %p117 = scmp.eq.s32.totalorder %s17, 3
      %p118 = por %p116, %p117
      %p119 = scmp.ne.s32.totalorder %s111, %s114
      %p120 = scmp.eq.s32.totalorder %s17, 0
      %p121 = por %p119, %p120
      %p122 = scmp.ne.s32.totalorder %s111, %s114
      %p123 = scmp.eq.s32.totalorder %s22, 3
      %p124 = por %p122, %p123
      %p125 = scmp.ne.s32.totalorder %s114, %s115
      %p126 = scmp.eq.s32.totalorder %s22, 0
      %p127 = por %p125, %p126
      %p128 = scmp.ne.s32.totalorder %s114, %s115
      %p129 = scmp.eq.s32.totalorder %s23, 3
      %p130 = por %p128, %p129
      %p132 = scmp.ne.s32.totalorder %s115, %s131
      %p133 = scmp.eq.s32.totalorder %s23, 0
      %p134 = por %p132, %p133
      %s135 = smul.u32 %s24, 2
      %s136 = sadd.s32 %s135, %s25
      %s137 = smul.u32 %s36, 2
      %s138 = sadd.s32 %s137, %s32
      %s139 = ssub.s32 %s136, %s138
      %p140 = scmp.eq.s32.totalorder %s139, 0
      %s142 = sadd.s32 %s141, 1
      %s143 = scalar_select %p140, %s141, %s142
      %p146 = pneg %p140
      %p147 = scmp.eq.s32.totalorder %s17, 3
      %p148 = por %p146, %p147
      %p149 = scmp.ne.s32.totalorder %s141, %s144
      %p150 = scmp.eq.s32.totalorder %s17, 0
      %p151 = por %p149, %p150
      %p152 = scmp.ne.s32.totalorder %s141, %s144
      %p153 = scmp.eq.s32.totalorder %s22, 3
      %p154 = por %p152, %p153
      %p155 = scmp.ne.s32.totalorder %s144, %s145
      %p156 = scmp.eq.s32.totalorder %s22, 0
      %p157 = por %p155, %p156
      %p158 = scmp.ne.s32.totalorder %s144, %s145
      %p159 = scmp.eq.s32.totalorder %s23, 3
      %p160 = por %p158, %p159
      %p162 = scmp.ne.s32.totalorder %s145, %s161
      %p163 = scmp.eq.s32.totalorder %s23, 0
      %p164 = por %p162, %p163
      %p165 = scmp.le.s32.totalorder 1, %s17
      %p166 = scmp.lt.s32.totalorder %s17, 5
      %p167 = pnand %p165, %p166
      %p168 = pneg %p167
      // Predicated region
      $region9: #{tpu_custom_call.1} parent=5 // pred_check
        _
      $region10: #{tpu_custom_call.1} parent=5 // pred_check_branch
        %170 = sbr.rel (%p167) target = $region12
      $region11: #{tpu_custom_call.1} parent=5 // pred_region
        %s171 = ssub.s32 %s17, 1
        // Predicated region
        $region13: #{tpu_custom_call.1} parent=11 // pred_check
          %p172 = pneg %p76
        $region14: #{tpu_custom_call.1} parent=11 // pred_check_branch
          %174 = sbr.rel (%p172) target = $region16
        $region15: #{tpu_custom_call.1} parent=11 // pred_region
          _
        $region16: #{tpu_custom_call.1} parent=11 // pred_fallthru
          _
        // Predicated region
        $region17: #{tpu_custom_call.1} parent=11 // pred_check
          %p175 = pneg %p97
        $region18: #{tpu_custom_call.1} parent=11 // pred_check_branch
          %177 = sbr.rel (%p175) target = $region20
        $region19: #{tpu_custom_call.1} parent=11 // pred_region
          _
        $region20: #{tpu_custom_call.1} parent=11 // pred_fallthru
          _
      $region12: #{tpu_custom_call.1} parent=5 // pred_fallthru
        _
      %p178 = scmp.lt.s32.totalorder %s17, 4
      // Predicated region
      $region21: #{tpu_custom_call.1} parent=5 // pred_check
        %p179 = pneg %p178
      $region22: #{tpu_custom_call.1} parent=5 // pred_check_branch
        %181 = sbr.rel (%p179) target = $region24
      $region23: #{tpu_custom_call.1} parent=5 // pred_region
        // Predicated region
        $region25: #{tpu_custom_call.1} parent=23 // pred_check
          %p182 = pneg %p49
        $region26: #{tpu_custom_call.1} parent=23 // pred_check_branch
          %184 = sbr.rel (%p182) target = $region28
        $region27: #{tpu_custom_call.1} parent=23 // pred_region
          %p185 = scmp.lt.s32.totalorder %s24, 1
          %s186 = scalar_select %p185, %s24, 1
          %s187 = smul.addr %s186, 54
          %s188 = smul.addr %s187, 8
          %s189 = scalar_lea.vmem %s0, %s188
        $region28: #{tpu_custom_call.1} parent=23 // pred_fallthru
          _
      $region24: #{tpu_custom_call.1} parent=5 // pred_fallthru
        _
      %p190 = scmp.le.s32.totalorder 1, %s17
      %p191 = scmp.lt.s32.totalorder %s17, 5
      %p192 = pnand %p190, %p191
      %p193 = pneg %p192
      // Predicated region
      $region29: #{tpu_custom_call.1} parent=5 // pred_check
        _
      $region30: #{tpu_custom_call.1} parent=5 // pred_check_branch
        %195 = sbr.rel (%p192) target = $region32
      $region31: #{tpu_custom_call.1} parent=5 // pred_region
        %s196 = ssub.s32 %s17, 1
        %p197 = scmp.lt.s32.totalorder %s26, 1
        %s198 = scalar_select %p197, %s26, 1
        %s199 = smul.addr %s198, 54
        %s200 = smul.addr %s199, 8
        %s201 = scalar_lea.vmem %s0, %s200
        %p202 = pneg %p55
        %p203 = pneg %p52
        %p204 = pneg %p76
        %p205 = pneg %p73
        %p206 = pneg %p97
        %p207 = pneg %p94
        %p208 = pneg %p127
        %p209 = pneg %p124
        %s210 = sand.u32 %s114, 1
        %s211 = scalar_lea.sflag [#allocation3], %s210
        %s212 = sand.u32 %s114, 1
        %s213 = smul.addr %s212, 128
        %s214 = scalar_lea.vmem [#allocation2], %s213
        %p215 = pneg %p157
        %p216 = pneg %p154
        %s217 = sand.u32 %s144, 1
        %s218 = scalar_lea.sflag [#allocation5], %s217
        %s219 = sand.u32 %s144, 1
        %s220 = smul.addr %s219, 8
        %s221 = scalar_lea.vmem [#allocation4], %s220
        %p222 = scmp.lt.s32.totalorder %s26, 1
        %s223 = scalar_select %p222, %s26, 1
        %s224 = smul.addr %s223, 54
        %s225 = smul.addr %s224, 8
        %s226 = scalar_lea.vmem %s0, %s225
        %s227 = smul.u32 %s26, 2
        %s228 = sadd.s32 %s227, %s27
        %s229 = smul.u32 16, %s228
        %s230 = smul.u32 %s26, 2
        %s231 = sadd.s32 %s230, %s27
        %s233 = smul.u32 %s27, 8
        %s234 = smul.u32 %s233, 24
        %s235 = scalar_lea.vmem %s226, %s234
        %v236 = vld [vmem:[%s235] sm:$0xff]
        %v237 = vld [vmem:[%s235 + $0x8] sm:$0xff]
        %v238 = vld [vmem:[%s235 + $0x18] sm:$0xff]
        %v239 = vld [vmem:[%s235 + $0x20] sm:$0xff]
        %v240 = vld [vmem:[%s235 + $0x30] sm:$0xff]
        %v241 = vld [vmem:[%s235 + $0x38] sm:$0xff]
        %v242 = vld [vmem:[%s235 + $0x48] sm:$0xff]
        %v243 = vld [vmem:[%s235 + $0x50] sm:$0xff]
        %v244 = vld [vmem:[%s235 + $0x60] sm:$0xff]
        %v245 = vld [vmem:[%s235 + $0x68] sm:$0xff]
        %v246 = vld [vmem:[%s235 + $0x78] sm:$0xff]
        %v247 = vld [vmem:[%s235 + $0x80] sm:$0xff]
        %v248 = vld [vmem:[%s235 + $0x90] sm:$0xff]
        %v249 = vld [vmem:[%s235 + $0x98] sm:$0xff]
        %v250 = vld [vmem:[%s235 + $0xa8] sm:$0xff]
        %v251 = vld [vmem:[%s235 + $0xb0] sm:$0xff]
        %v252 = vld [vmem:[%s235 + $0x1] sm:$0xff]
        %v253 = vld [vmem:[%s235 + $0x9] sm:$0xff]
        %v254 = vld [vmem:[%s235 + $0x19] sm:$0xff]
        %v255 = vld [vmem:[%s235 + $0x21] sm:$0xff]
        %v256 = vld [vmem:[%s235 + $0x31] sm:$0xff]
        %v257 = vld [vmem:[%s235 + $0x39] sm:$0xff]
        %v258 = vld [vmem:[%s235 + $0x49] sm:$0xff]
        %v259 = vld [vmem:[%s235 + $0x51] sm:$0xff]
        %v260 = vld [vmem:[%s235 + $0x61] sm:$0xff]
        %v261 = vld [vmem:[%s235 + $0x69] sm:$0xff]
        %v262 = vld [vmem:[%s235 + $0x79] sm:$0xff]
        %v263 = vld [vmem:[%s235 + $0x81] sm:$0xff]
        %v264 = vld [vmem:[%s235 + $0x91] sm:$0xff]
        %v265 = vld [vmem:[%s235 + $0x99] sm:$0xff]
        %v266 = vld [vmem:[%s235 + $0xa9] sm:$0xff]
        %v267 = vld [vmem:[%s235 + $0xb1] sm:$0xff]
        %v268 = vld [vmem:[%s235 + $0x2] sm:$0xff]
        %v269 = vld [vmem:[%s235 + $0xa] sm:$0xff]
        %v270 = vld [vmem:[%s235 + $0x1a] sm:$0xff]
        %v271 = vld [vmem:[%s235 + $0x22] sm:$0xff]
        %v272 = vld [vmem:[%s235 + $0x32] sm:$0xff]
        %v273 = vld [vmem:[%s235 + $0x3a] sm:$0xff]
        %v274 = vld [vmem:[%s235 + $0x4a] sm:$0xff]
        %v275 = vld [vmem:[%s235 + $0x52] sm:$0xff]
        %v276 = vld [vmem:[%s235 + $0x62] sm:$0xff]
        %v277 = vld [vmem:[%s235 + $0x6a] sm:$0xff]
        %v278 = vld [vmem:[%s235 + $0x7a] sm:$0xff]
        %v279 = vld [vmem:[%s235 + $0x82] sm:$0xff]
        %v280 = vld [vmem:[%s235 + $0x92] sm:$0xff]
        %v281 = vld [vmem:[%s235 + $0x9a] sm:$0xff]
        %v282 = vld [vmem:[%s235 + $0xaa] sm:$0xff]
        %v283 = vld [vmem:[%s235 + $0xb2] sm:$0xff]
        %s284 = sadd.s32 %s233, 1
        %s285 = smul.u32 %s284, 24
        %s286 = scalar_lea.vmem %s226, %s285
        %v287 = vld [vmem:[%s286] sm:$0xff]
        %v288 = vld [vmem:[%s286 + $0x8] sm:$0xff]
        %v289 = vld [vmem:[%s286 + $0x18] sm:$0xff]
        %v290 = vld [vmem:[%s286 + $0x20] sm:$0xff]
        %v291 = vld [vmem:[%s286 + $0x30] sm:$0xff]
        %v292 = vld [vmem:[%s286 + $0x38] sm:$0xff]
        %v293 = vld [vmem:[%s286 + $0x48] sm:$0xff]
        %v294 = vld [vmem:[%s286 + $0x50] sm:$0xff]
        %v295 = vld [vmem:[%s286 + $0x60] sm:$0xff]
        %v296 = vld [vmem:[%s286 + $0x68] sm:$0xff]
        %v297 = vld [vmem:[%s286 + $0x78] sm:$0xff]
        %v298 = vld [vmem:[%s286 + $0x80] sm:$0xff]
        %v299 = vld [vmem:[%s286 + $0x90] sm:$0xff]
        %v300 = vld [vmem:[%s286 + $0x98] sm:$0xff]
        %v301 = vld [vmem:[%s286 + $0xa8] sm:$0xff]
        %v302 = vld [vmem:[%s286 + $0xb0] sm:$0xff]
        %v303 = vld [vmem:[%s286 + $0x1] sm:$0xff]
        %v304 = vld [vmem:[%s286 + $0x9] sm:$0xff]
        %v305 = vld [vmem:[%s286 + $0x19] sm:$0xff]
        %v306 = vld [vmem:[%s286 + $0x21] sm:$0xff]
        %v307 = vld [vmem:[%s286 + $0x31] sm:$0xff]
        %v308 = vld [vmem:[%s286 + $0x39] sm:$0xff]
        %v309 = vld [vmem:[%s286 + $0x49] sm:$0xff]
        %v310 = vld [vmem:[%s286 + $0x51] sm:$0xff]
        %v311 = vld [vmem:[%s286 + $0x61] sm:$0xff]
        %v312 = vld [vmem:[%s286 + $0x69] sm:$0xff]
        %v313 = vld [vmem:[%s286 + $0x79] sm:$0xff]
        %v314 = vld [vmem:[%s286 + $0x81] sm:$0xff]
        %v315 = vld [vmem:[%s286 + $0x91] sm:$0xff]
        %v316 = vld [vmem:[%s286 + $0x99] sm:$0xff]
        %v317 = vld [vmem:[%s286 + $0xa9] sm:$0xff]
        %v318 = vld [vmem:[%s286 + $0xb1] sm:$0xff]
        %v319 = vld [vmem:[%s286 + $0x2] sm:$0xff]
        %v320 = vld [vmem:[%s286 + $0xa] sm:$0xff]
        %v321 = vld [vmem:[%s286 + $0x1a] sm:$0xff]
        %v322 = vld [vmem:[%s286 + $0x22] sm:$0xff]
        %v323 = vld [vmem:[%s286 + $0x32] sm:$0xff]
        %v324 = vld [vmem:[%s286 + $0x3a] sm:$0xff]
        %v325 = vld [vmem:[%s286 + $0x4a] sm:$0xff]
        %v326 = vld [vmem:[%s286 + $0x52] sm:$0xff]
        %v327 = vld [vmem:[%s286 + $0x62] sm:$0xff]
        %v328 = vld [vmem:[%s286 + $0x6a] sm:$0xff]
        %v329 = vld [vmem:[%s286 + $0x7a] sm:$0xff]
        %v330 = vld [vmem:[%s286 + $0x82] sm:$0xff]
        %v331 = vld [vmem:[%s286 + $0x92] sm:$0xff]
        %v332 = vld [vmem:[%s286 + $0x9a] sm:$0xff]
        %v333 = vld [vmem:[%s286 + $0xaa] sm:$0xff]
        %v334 = vld [vmem:[%s286 + $0xb2] sm:$0xff]
        %s335 = sadd.s32 %s233, 2
        %s336 = smul.u32 %s335, 24
        %s337 = scalar_lea.vmem %s226, %s336
        %v338 = vld [vmem:[%s337] sm:$0xff]
        %v339 = vld [vmem:[%s337 + $0x8] sm:$0xff]
        %v340 = vld [vmem:[%s337 + $0x18] sm:$0xff]
        %v341 = vld [vmem:[%s337 + $0x20] sm:$0xff]
        %v342 = vld [vmem:[%s337 + $0x30] sm:$0xff]
        %v343 = vld [vmem:[%s337 + $0x38] sm:$0xff]
        %v344 = vld [vmem:[%s337 + $0x48] sm:$0xff]
        %v345 = vld [vmem:[%s337 + $0x50] sm:$0xff]
        %v346 = vld [vmem:[%s337 + $0x60] sm:$0xff]
        %v347 = vld [vmem:[%s337 + $0x68] sm:$0xff]
        %v348 = vld [vmem:[%s337 + $0x78] sm:$0xff]
        %v349 = vld [vmem:[%s337 + $0x80] sm:$0xff]
        %v350 = vld [vmem:[%s337 + $0x90] sm:$0xff]
        %v351 = vld [vmem:[%s337 + $0x98] sm:$0xff]
        %v352 = vld [vmem:[%s337 + $0xa8] sm:$0xff]
        %v353 = vld [vmem:[%s337 + $0xb0] sm:$0xff]
        %v354 = vld [vmem:[%s337 + $0x1] sm:$0xff]
        %v355 = vld [vmem:[%s337 + $0x9] sm:$0xff]
        %v356 = vld [vmem:[%s337 + $0x19] sm:$0xff]
        %v357 = vld [vmem:[%s337 + $0x21] sm:$0xff]
        %v358 = vld [vmem:[%s337 + $0x31] sm:$0xff]
        %v359 = vld [vmem:[%s337 + $0x39] sm:$0xff]
        %v360 = vld [vmem:[%s337 + $0x49] sm:$0xff]
        %v361 = vld [vmem:[%s337 + $0x51] sm:$0xff]
        %v362 = vld [vmem:[%s337 + $0x61] sm:$0xff]
        %v363 = vld [vmem:[%s337 + $0x69] sm:$0xff]
        %v364 = vld [vmem:[%s337 + $0x79] sm:$0xff]
        %v365 = vld [vmem:[%s337 + $0x81] sm:$0xff]
        %v366 = vld [vmem:[%s337 + $0x91] sm:$0xff]
        %v367 = vld [vmem:[%s337 + $0x99] sm:$0xff]
        %v368 = vld [vmem:[%s337 + $0xa9] sm:$0xff]
        %v369 = vld [vmem:[%s337 + $0xb1] sm:$0xff]
        %v370 = vld [vmem:[%s337 + $0x2] sm:$0xff]
        %v371 = vld [vmem:[%s337 + $0xa] sm:$0xff]
        %v372 = vld [vmem:[%s337 + $0x1a] sm:$0xff]
        %v373 = vld [vmem:[%s337 + $0x22] sm:$0xff]
        %v374 = vld [vmem:[%s337 + $0x32] sm:$0xff]
        %v375 = vld [vmem:[%s337 + $0x3a] sm:$0xff]
        %v376 = vld [vmem:[%s337 + $0x4a] sm:$0xff]
        %v377 = vld [vmem:[%s337 + $0x52] sm:$0xff]
        %v378 = vld [vmem:[%s337 + $0x62] sm:$0xff]
        %v379 = vld [vmem:[%s337 + $0x6a] sm:$0xff]
        %v380 = vld [vmem:[%s337 + $0x7a] sm:$0xff]
        %v381 = vld [vmem:[%s337 + $0x82] sm:$0xff]
        %v382 = vld [vmem:[%s337 + $0x92] sm:$0xff]
        %v383 = vld [vmem:[%s337 + $0x9a] sm:$0xff]
        %v384 = vld [vmem:[%s337 + $0xaa] sm:$0xff]
        %v385 = vld [vmem:[%s337 + $0xb2] sm:$0xff]
        %402 = vrot.lane.b32.xlu0 %v252, 8
        %v403 = vpop.permute.xlu0 %402
        %404 = vrot.lane.b32.xlu0 %v253, 8
        %v405 = vpop.permute.xlu0 %404
        %406 = vrot.lane.b32.xlu0 %v254, 8
        %v407 = vpop.permute.xlu0 %406
        %408 = vrot.lane.b32.xlu0 %v255, 8
        %v409 = vpop.permute.xlu0 %408
        %410 = vrot.lane.b32.xlu0 %v256, 8
        %v411 = vpop.permute.xlu0 %410
        %412 = vrot.lane.b32.xlu0 %v257, 8
        %v413 = vpop.permute.xlu0 %412
        %414 = vrot.lane.b32.xlu0 %v258, 8
        %v415 = vpop.permute.xlu0 %414
        %416 = vrot.lane.b32.xlu0 %v259, 8
        %v417 = vpop.permute.xlu0 %416
        %418 = vrot.lane.b32.xlu0 %v260, 8
        %v419 = vpop.permute.xlu0 %418
        %420 = vrot.lane.b32.xlu0 %v261, 8
        %v421 = vpop.permute.xlu0 %420
        %422 = vrot.lane.b32.xlu0 %v262, 8
        %v423 = vpop.permute.xlu0 %422
        %424 = vrot.lane.b32.xlu0 %v263, 8
        %v425 = vpop.permute.xlu0 %424
        %426 = vrot.lane.b32.xlu0 %v264, 8
        %v427 = vpop.permute.xlu0 %426
        %428 = vrot.lane.b32.xlu0 %v265, 8
        %v429 = vpop.permute.xlu0 %428
        %430 = vrot.lane.b32.xlu0 %v266, 8
        %v431 = vpop.permute.xlu0 %430
        %432 = vrot.lane.b32.xlu0 %v267, 8
        %v433 = vpop.permute.xlu0 %432
        %466 = vrot.lane.b32.xlu0 %v268, 16
        %v467 = vpop.permute.xlu0 %466
        %468 = vrot.lane.b32.xlu0 %v269, 16
        %v469 = vpop.permute.xlu0 %468
        %470 = vrot.lane.b32.xlu0 %v270, 16
        %v471 = vpop.permute.xlu0 %470
        %472 = vrot.lane.b32.xlu0 %v271, 16
        %v473 = vpop.permute.xlu0 %472
        %474 = vrot.lane.b32.xlu0 %v272, 16
        %v475 = vpop.permute.xlu0 %474
        %476 = vrot.lane.b32.xlu0 %v273, 16
        %v477 = vpop.permute.xlu0 %476
        %478 = vrot.lane.b32.xlu0 %v274, 16
        %v479 = vpop.permute.xlu0 %478
        %480 = vrot.lane.b32.xlu0 %v275, 16
        %v481 = vpop.permute.xlu0 %480
        %482 = vrot.lane.b32.xlu0 %v276, 16
        %v483 = vpop.permute.xlu0 %482
        %484 = vrot.lane.b32.xlu0 %v277, 16
        %v485 = vpop.permute.xlu0 %484
        %486 = vrot.lane.b32.xlu0 %v278, 16
        %v487 = vpop.permute.xlu0 %486
        %488 = vrot.lane.b32.xlu0 %v279, 16
        %v489 = vpop.permute.xlu0 %488
        %490 = vrot.lane.b32.xlu0 %v280, 16
        %v491 = vpop.permute.xlu0 %490
        %492 = vrot.lane.b32.xlu0 %v281, 16
        %v493 = vpop.permute.xlu0 %492
        %494 = vrot.lane.b32.xlu0 %v282, 16
        %v495 = vpop.permute.xlu0 %494
        %496 = vrot.lane.b32.xlu0 %v283, 16
        %v497 = vpop.permute.xlu0 %496
        %530 = vrot.lane.b32.xlu0 %v287, 24
        %v531 = vpop.permute.xlu0 %530
        %532 = vrot.lane.b32.xlu0 %v288, 24
        %v533 = vpop.permute.xlu0 %532
        %534 = vrot.lane.b32.xlu0 %v289, 24
        %v535 = vpop.permute.xlu0 %534
        %536 = vrot.lane.b32.xlu0 %v290, 24
        %v537 = vpop.permute.xlu0 %536
        %538 = vrot.lane.b32.xlu0 %v291, 24
        %v539 = vpop.permute.xlu0 %538
        %540 = vrot.lane.b32.xlu0 %v292, 24
        %v541 = vpop.permute.xlu0 %540
        %542 = vrot.lane.b32.xlu0 %v293, 24
        %v543 = vpop.permute.xlu0 %542
        %544 = vrot.lane.b32.xlu0 %v294, 24
        %v545 = vpop.permute.xlu0 %544
        %546 = vrot.lane.b32.xlu0 %v295, 24
        %v547 = vpop.permute.xlu0 %546
        %548 = vrot.lane.b32.xlu0 %v296, 24
        %v549 = vpop.permute.xlu0 %548
        %550 = vrot.lane.b32.xlu0 %v297, 24
        %v551 = vpop.permute.xlu0 %550
        %552 = vrot.lane.b32.xlu0 %v298, 24
        %v553 = vpop.permute.xlu0 %552
        %554 = vrot.lane.b32.xlu0 %v299, 24
        %v555 = vpop.permute.xlu0 %554
        %556 = vrot.lane.b32.xlu0 %v300, 24
        %v557 = vpop.permute.xlu0 %556
        %558 = vrot.lane.b32.xlu0 %v301, 24
        %v559 = vpop.permute.xlu0 %558
        %560 = vrot.lane.b32.xlu0 %v302, 24
        %v561 = vpop.permute.xlu0 %560
        %594 = vrot.lane.b32.xlu0 %v303, 32
        %v595 = vpop.permute.xlu0 %594
        %596 = vrot.lane.b32.xlu0 %v304, 32
        %v597 = vpop.permute.xlu0 %596
        %598 = vrot.lane.b32.xlu0 %v305, 32
        %v599 = vpop.permute.xlu0 %598
        %600 = vrot.lane.b32.xlu0 %v306, 32
        %v601 = vpop.permute.xlu0 %600
        %602 = vrot.lane.b32.xlu0 %v307, 32
        %v603 = vpop.permute.xlu0 %602
        %604 = vrot.lane.b32.xlu0 %v308, 32
        %v605 = vpop.permute.xlu0 %604
        %606 = vrot.lane.b32.xlu0 %v309, 32
        %v607 = vpop.permute.xlu0 %606
        %608 = vrot.lane.b32.xlu0 %v310, 32
        %v609 = vpop.permute.xlu0 %608
        %610 = vrot.lane.b32.xlu0 %v311, 32
        %v611 = vpop.permute.xlu0 %610
        %612 = vrot.lane.b32.xlu0 %v312, 32
        %v613 = vpop.permute.xlu0 %612
        %614 = vrot.lane.b32.xlu0 %v313, 32
        %v615 = vpop.permute.xlu0 %614
        %616 = vrot.lane.b32.xlu0 %v314, 32
        %v617 = vpop.permute.xlu0 %616
        %618 = vrot.lane.b32.xlu0 %v315, 32
        %v619 = vpop.permute.xlu0 %618
        %620 = vrot.lane.b32.xlu0 %v316, 32
        %v621 = vpop.permute.xlu0 %620
        %622 = vrot.lane.b32.xlu0 %v317, 32
        %v623 = vpop.permute.xlu0 %622
        %624 = vrot.lane.b32.xlu0 %v318, 32
        %v625 = vpop.permute.xlu0 %624
        %658 = vrot.lane.b32.xlu0 %v319, 40
        %v659 = vpop.permute.xlu0 %658
        %660 = vrot.lane.b32.xlu0 %v320, 40
        %v661 = vpop.permute.xlu0 %660
        %662 = vrot.lane.b32.xlu0 %v321, 40
        %v663 = vpop.permute.xlu0 %662
        %664 = vrot.lane.b32.xlu0 %v322, 40
        %v665 = vpop.permute.xlu0 %664
        %666 = vrot.lane.b32.xlu0 %v323, 40
        %v667 = vpop.permute.xlu0 %666
        %668 = vrot.lane.b32.xlu0 %v324, 40
        %v669 = vpop.permute.xlu0 %668
        %670 = vrot.lane.b32.xlu0 %v325, 40
        %v671 = vpop.permute.xlu0 %670
        %672 = vrot.lane.b32.xlu0 %v326, 40
        %v673 = vpop.permute.xlu0 %672
        %674 = vrot.lane.b32.xlu0 %v327, 40
        %v675 = vpop.permute.xlu0 %674
        %676 = vrot.lane.b32.xlu0 %v328, 40
        %v677 = vpop.permute.xlu0 %676
        %678 = vrot.lane.b32.xlu0 %v329, 40
        %v679 = vpop.permute.xlu0 %678
        %680 = vrot.lane.b32.xlu0 %v330, 40
        %v681 = vpop.permute.xlu0 %680
        %682 = vrot.lane.b32.xlu0 %v331, 40
        %v683 = vpop.permute.xlu0 %682
        %684 = vrot.lane.b32.xlu0 %v332, 40
        %v685 = vpop.permute.xlu0 %684
        %686 = vrot.lane.b32.xlu0 %v333, 40
        %v687 = vpop.permute.xlu0 %686
        %688 = vrot.lane.b32.xlu0 %v334, 40
        %v689 = vpop.permute.xlu0 %688
        %722 = vrot.lane.b32.xlu0 %v338, 48
        %v723 = vpop.permute.xlu0 %722
        %724 = vrot.lane.b32.xlu0 %v339, 48
        %v725 = vpop.permute.xlu0 %724
        %726 = vrot.lane.b32.xlu0 %v340, 48
        %v727 = vpop.permute.xlu0 %726
        %728 = vrot.lane.b32.xlu0 %v341, 48
        %v729 = vpop.permute.xlu0 %728
        %730 = vrot.lane.b32.xlu0 %v342, 48
        %v731 = vpop.permute.xlu0 %730
        %732 = vrot.lane.b32.xlu0 %v343, 48
        %v733 = vpop.permute.xlu0 %732
        %734 = vrot.lane.b32.xlu0 %v344, 48
        %v735 = vpop.permute.xlu0 %734
        %736 = vrot.lane.b32.xlu0 %v345, 48
        %v737 = vpop.permute.xlu0 %736
        %738 = vrot.lane.b32.xlu0 %v346, 48
        %v739 = vpop.permute.xlu0 %738
        %740 = vrot.lane.b32.xlu0 %v347, 48
        %v741 = vpop.permute.xlu0 %740
        %742 = vrot.lane.b32.xlu0 %v348, 48
        %v743 = vpop.permute.xlu0 %742
        %744 = vrot.lane.b32.xlu0 %v349, 48
        %v745 = vpop.permute.xlu0 %744
        %746 = vrot.lane.b32.xlu0 %v350, 48
        %v747 = vpop.permute.xlu0 %746
        %748 = vrot.lane.b32.xlu0 %v351, 48
        %v749 = vpop.permute.xlu0 %748
        %750 = vrot.lane.b32.xlu0 %v352, 48
        %v751 = vpop.permute.xlu0 %750
        %752 = vrot.lane.b32.xlu0 %v353, 48
        %v753 = vpop.permute.xlu0 %752
        %786 = vrot.lane.b32.xlu0 %v354, 56
        %v787 = vpop.permute.xlu0 %786
        %788 = vrot.lane.b32.xlu0 %v355, 56
        %v789 = vpop.permute.xlu0 %788
        %790 = vrot.lane.b32.xlu0 %v356, 56
        %v791 = vpop.permute.xlu0 %790
        %792 = vrot.lane.b32.xlu0 %v357, 56
        %v793 = vpop.permute.xlu0 %792
        %794 = vrot.lane.b32.xlu0 %v358, 56
        %v795 = vpop.permute.xlu0 %794
        %796 = vrot.lane.b32.xlu0 %v359, 56
        %v797 = vpop.permute.xlu0 %796
        %798 = vrot.lane.b32.xlu0 %v360, 56
        %v799 = vpop.permute.xlu0 %798
        %800 = vrot.lane.b32.xlu0 %v361, 56
        %v801 = vpop.permute.xlu0 %800
        %802 = vrot.lane.b32.xlu0 %v362, 56
        %v803 = vpop.permute.xlu0 %802
        %804 = vrot.lane.b32.xlu0 %v363, 56
        %v805 = vpop.permute.xlu0 %804
        %806 = vrot.lane.b32.xlu0 %v364, 56
        %v807 = vpop.permute.xlu0 %806
        %808 = vrot.lane.b32.xlu0 %v365, 56
        %v809 = vpop.permute.xlu0 %808
        %810 = vrot.lane.b32.xlu0 %v366, 56
        %v811 = vpop.permute.xlu0 %810
        %812 = vrot.lane.b32.xlu0 %v367, 56
        %v813 = vpop.permute.xlu0 %812
        %814 = vrot.lane.b32.xlu0 %v368, 56
        %v815 = vpop.permute.xlu0 %814
        %816 = vrot.lane.b32.xlu0 %v369, 56
        %v817 = vpop.permute.xlu0 %816
        %850 = vrot.lane.b32.xlu0 %v370, 64
        %v851 = vpop.permute.xlu0 %850
        %852 = vrot.lane.b32.xlu0 %v371, 64
        %v853 = vpop.permute.xlu0 %852
        %854 = vrot.lane.b32.xlu0 %v372, 64
        %v855 = vpop.permute.xlu0 %854
        %856 = vrot.lane.b32.xlu0 %v373, 64
        %v857 = vpop.permute.xlu0 %856
        %858 = vrot.lane.b32.xlu0 %v374, 64
        %v859 = vpop.permute.xlu0 %858
        %860 = vrot.lane.b32.xlu0 %v375, 64
        %v861 = vpop.permute.xlu0 %860
        %862 = vrot.lane.b32.xlu0 %v376, 64
        %v863 = vpop.permute.xlu0 %862
        %864 = vrot.lane.b32.xlu0 %v377, 64
        %v865 = vpop.permute.xlu0 %864
        %866 = vrot.lane.b32.xlu0 %v378, 64
        %v867 = vpop.permute.xlu0 %866
        %868 = vrot.lane.b32.xlu0 %v379, 64
        %v869 = vpop.permute.xlu0 %868
        %870 = vrot.lane.b32.xlu0 %v380, 64
        %v871 = vpop.permute.xlu0 %870
        %872 = vrot.lane.b32.xlu0 %v381, 64
        %v873 = vpop.permute.xlu0 %872
        %874 = vrot.lane.b32.xlu0 %v382, 64
        %v875 = vpop.permute.xlu0 %874
        %876 = vrot.lane.b32.xlu0 %v383, 64
        %v877 = vpop.permute.xlu0 %876
        %878 = vrot.lane.b32.xlu0 %v384, 64
        %v879 = vpop.permute.xlu0 %878
        %880 = vrot.lane.b32.xlu0 %v385, 64
        %v881 = vpop.permute.xlu0 %880
        %vm898 = vcmask 64512
        %v899 = vsel %vm898, %v236, %v403
        %v900 = vsel %vm898, %v237, %v405
        %v901 = vsel %vm898, %v238, %v407
        %v902 = vsel %vm898, %v239, %v409
        %v903 = vsel %vm898, %v240, %v411
        %v904 = vsel %vm898, %v241, %v413
        %v905 = vsel %vm898, %v242, %v415
        %v906 = vsel %vm898, %v243, %v417
        %v907 = vsel %vm898, %v244, %v419
        %v908 = vsel %vm898, %v245, %v421
        %v909 = vsel %vm898, %v246, %v423
        %v910 = vsel %vm898, %v247, %v425
        %v911 = vsel %vm898, %v248, %v427
        %v912 = vsel %vm898, %v249, %v429
        %v913 = vsel %vm898, %v250, %v431
        %v914 = vsel %vm898, %v251, %v433
        %vm915 = vcmask 130048
        %v916 = vsel %vm915, %v899, %v467
        %v917 = vsel %vm915, %v900, %v469
        %v918 = vsel %vm915, %v901, %v471
        %v919 = vsel %vm915, %v902, %v473
        %v920 = vsel %vm915, %v903, %v475
        %v921 = vsel %vm915, %v904, %v477
        %v922 = vsel %vm915, %v905, %v479
        %v923 = vsel %vm915, %v906, %v481
        %v924 = vsel %vm915, %v907, %v483
        %v925 = vsel %vm915, %v908, %v485
        %v926 = vsel %vm915, %v909, %v487
        %v927 = vsel %vm915, %v910, %v489
        %v928 = vsel %vm915, %v911, %v491
        %v929 = vsel %vm915, %v912, %v493
        %v930 = vsel %vm915, %v913, %v495
        %v931 = vsel %vm915, %v914, %v497
        %vm932 = vcmask 195584
        %v933 = vsel %vm932, %v916, %v531
        %v934 = vsel %vm932, %v917, %v533
        %v935 = vsel %vm932, %v918, %v535
        %v936 = vsel %vm932, %v919, %v537
        %v937 = vsel %vm932, %v920, %v539
        %v938 = vsel %vm932, %v921, %v541
        %v939 = vsel %vm932, %v922, %v543
        %v940 = vsel %vm932, %v923, %v545
        %v941 = vsel %vm932, %v924, %v547
        %v942 = vsel %vm932, %v925, %v549
        %v943 = vsel %vm932, %v926, %v551
        %v944 = vsel %vm932, %v927, %v553
        %v945 = vsel %vm932, %v928, %v555
        %v946 = vsel %vm932, %v929, %v557
        %v947 = vsel %vm932, %v930, %v559
        %v948 = vsel %vm932, %v931, %v561
        %vm949 = vcmask 261120
        %v950 = vsel %vm949, %v933, %v595
        %v951 = vsel %vm949, %v934, %v597
        %v952 = vsel %vm949, %v935, %v599
        %v953 = vsel %vm949, %v936, %v601
        %v954 = vsel %vm949, %v937, %v603
        %v955 = vsel %vm949, %v938, %v605
        %v956 = vsel %vm949, %v939, %v607
        %v957 = vsel %vm949, %v940, %v609
        %v958 = vsel %vm949, %v941, %v611
        %v959 = vsel %vm949, %v942, %v613
        %v960 = vsel %vm949, %v943, %v615
        %v961 = vsel %vm949, %v944, %v617
        %v962 = vsel %vm949, %v945, %v619
        %v963 = vsel %vm949, %v946, %v621
        %v964 = vsel %vm949, %v947, %v623
        %v965 = vsel %vm949, %v948, %v625
        %vm966 = vcmask 326656
        %v967 = vsel %vm966, %v950, %v659
        %v968 = vsel %vm966, %v951, %v661
        %v969 = vsel %vm966, %v952, %v663
        %v970 = vsel %vm966, %v953, %v665
        %v971 = vsel %vm966, %v954, %v667
        %v972 = vsel %vm966, %v955, %v669
        %v973 = vsel %vm966, %v956, %v671
        %v974 = vsel %vm966, %v957, %v673
        %v975 = vsel %vm966, %v958, %v675
        %v976 = vsel %vm966, %v959, %v677
        %v977 = vsel %vm966, %v960, %v679
        %v978 = vsel %vm966, %v961, %v681
        %v979 = vsel %vm966, %v962, %v683
        %v980 = vsel %vm966, %v963, %v685
        %v981 = vsel %vm966, %v964, %v687
        %v982 = vsel %vm966, %v965, %v689
        %vm983 = vcmask 392192
        %v984 = vsel %vm983, %v967, %v723
        %v985 = vsel %vm983, %v968, %v725
        %v986 = vsel %vm983, %v969, %v727
        %v987 = vsel %vm983, %v970, %v729
        %v988 = vsel %vm983, %v971, %v731
        %v989 = vsel %vm983, %v972, %v733
        %v990 = vsel %vm983, %v973, %v735
        %v991 = vsel %vm983, %v974, %v737
        %v992 = vsel %vm983, %v975, %v739
        %v993 = vsel %vm983, %v976, %v741
        %v994 = vsel %vm983, %v977, %v743
        %v995 = vsel %vm983, %v978, %v745
        %v996 = vsel %vm983, %v979, %v747
        %v997 = vsel %vm983, %v980, %v749
        %v998 = vsel %vm983, %v981, %v751
        %v999 = vsel %vm983, %v982, %v753
        %vm1000 = vcmask 457728
        %v1001 = vsel %vm1000, %v984, %v787
        %v1002 = vsel %vm1000, %v985, %v789
        %v1003 = vsel %vm1000, %v986, %v791
        %v1004 = vsel %vm1000, %v987, %v793
        %v1005 = vsel %vm1000, %v988, %v795
        %v1006 = vsel %vm1000, %v989, %v797
        %v1007 = vsel %vm1000, %v990, %v799
        %v1008 = vsel %vm1000, %v991, %v801
        %v1009 = vsel %vm1000, %v992, %v803
        %v1010 = vsel %vm1000, %v993, %v805
        %v1011 = vsel %vm1000, %v994, %v807
        %v1012 = vsel %vm1000, %v995, %v809
        %v1013 = vsel %vm1000, %v996, %v811
        %v1014 = vsel %vm1000, %v997, %v813
        %v1015 = vsel %vm1000, %v998, %v815
        %v1016 = vsel %vm1000, %v999, %v817
        %vm1017 = vcmask 523264
        %v1018 = vsel %vm1017, %v1001, %v851
        %v1019 = vsel %vm1017, %v1002, %v853
        %v1020 = vsel %vm1017, %v1003, %v855
        %v1021 = vsel %vm1017, %v1004, %v857
        %v1022 = vsel %vm1017, %v1005, %v859
        %v1023 = vsel %vm1017, %v1006, %v861
        %v1024 = vsel %vm1017, %v1007, %v863
        %v1025 = vsel %vm1017, %v1008, %v865
        %v1026 = vsel %vm1017, %v1009, %v867
        %v1027 = vsel %vm1017, %v1010, %v869
        %v1028 = vsel %vm1017, %v1011, %v871
        %v1029 = vsel %vm1017, %v1012, %v873
        %v1030 = vsel %vm1017, %v1013, %v875
        %v1031 = vsel %vm1017, %v1014, %v877
        %v1032 = vsel %vm1017, %v1015, %v879
        %v1033 = vsel %vm1017, %v1016, %v881
        %v1034 = vpack.c.bf16 %v1019, %v1018
        %v1035 = vpack.c.bf16 %v1021, %v1020
        %v1036 = vpack.c.bf16 %v1023, %v1022
        %v1037 = vpack.c.bf16 %v1025, %v1024
        %v1038 = vpack.c.bf16 %v1027, %v1026
        %v1039 = vpack.c.bf16 %v1029, %v1028
        %v1040 = vpack.c.bf16 %v1031, %v1030
        %v1041 = vpack.c.bf16 %v1033, %v1032
        %v1042 = vld [vmem:[%s1] sm:$0xf]
        %v1043 = vld [vmem:[%s1 + $0x4] sm:$0xf]
        %v1044 = vld [vmem:[%s1 + $0x8] sm:$0xf]
        %v1045 = vld [vmem:[%s1 + $0xc] sm:$0xf]
        %v1046 = vld [vmem:[%s1 + $0x10] sm:$0xf]
        %v1047 = vld [vmem:[%s1 + $0x14] sm:$0xf]
        %v1048 = vld [vmem:[%s1 + $0x18] sm:$0xf]
        %v1049 = vld [vmem:[%s1 + $0x1c] sm:$0xf]
        %v1050 = vld [vmem:[%s1 + $0x20] sm:$0xf]
        %v1051 = vld [vmem:[%s2] sm:$0x1]
        %v1053 = vlaneseq
        %v1054 = vshrl.u32 %v1053, 7
        %v1055 = vsub.s32 0, %v1054
        %v1056 = vrot.slane %v1051, %v1055
        %v1067 = vunpack.c.l.b16 %v1042
        %v1068 = vunpack.c.l.b16 %v1043
        %v1069 = vunpack.c.l.b16 %v1044
        %v1070 = vunpack.c.l.b16 %v1045
        %v1071 = vunpack.c.l.b16 %v1046
        %v1072 = vunpack.c.l.b16 %v1047
        %v1073 = vunpack.c.l.b16 %v1048
        %v1074 = vunpack.c.l.b16 %v1049
        %v1075 = vunpack.c.l.b16 %v1050
        %v1076 = vpack.c.b16 %v1068, %v1067
        %v1077 = vpack.c.b16 %v1070, %v1069
        %v1078 = vpack.c.b16 %v1072, %v1071
        %v1079 = vpack.c.b16 %v1074, %v1073
        %v1080 = vpack.c.b16 %v1075, %v1075
        %vm1085 = vcmask 588800
        %v1087 = vsel %vm1085, %v1034, 0
        %v1090 = vsel %vm1085, %v1035, 0
        %v1093 = vsel %vm1085, %v1036, 0
        %v1096 = vsel %vm1085, %v1037, 0
        %v1099 = vsel %vm1085, %v1038, 0
        %v1102 = vsel %vm1085, %v1039, 0
        %v1105 = vsel %vm1085, %v1040, 0
        %v1108 = vsel %vm1085, %v1041, 0
        %vm1110 = vcmask 1043456
        %v1112 = vsel %vm1110, %v1080, 0
        %1114 = vmatprep.subr.bf16.mxu0 0
        %1115 = vmatpush1.bf16.msra.mxu0 %v1076
        %1116 = vmatprep.subr.bf16.mxu0 0
        %1117 = vmatpush1.bf16.msra.mxu0 %v1077
        %1118 = vmatprep.subr.bf16.mxu0 0
        %1119 = vmatpush1.bf16.msra.mxu0 %v1078
        %1120 = vmatprep.subr.bf16.mxu0 0
        %1121 = vmatpush1.bf16.msra.mxu0 %v1079
        %1122 = vmatprep.subr.bf16.mxu0 0
        %1123 = vmatpush1.bf16.msra.mxu0 %v1112
        %1124 = vmatprep.subr.bf16.mxu0 0
        %1125 = vmatpush1.bf16.msra.mxu0 0
        %1126 = vmatprep.subr.bf16.mxu0 0
        %1127 = vmatpush1.bf16.msra.mxu0 0
        %1128 = vmatprep.subr.bf16.mxu0 0
        %1129 = vmatpush1.bf16.msra.mxu0 0
        %1130 = vmatprep.subr.bf16.mxu0 0
        %1131 = vmatpush1.bf16.msra.mxu0 0
        %1132 = vmatprep.subr.bf16.mxu0 0
        %1133 = vmatpush1.bf16.msra.mxu0 0
        %1134 = vmatprep.subr.bf16.mxu0 0
        %1135 = vmatpush1.bf16.msra.mxu0 0
        %1136 = vmatprep.subr.bf16.mxu0 0
        %1137 = vmatpush1.bf16.msra.mxu0 0
        %1138 = vmatprep.subr.bf16.mxu0 0
        %1139 = vmatpush1.bf16.msra.mxu0 0
        %1140 = vmatprep.subr.bf16.mxu0 0
        %1141 = vmatpush1.bf16.msra.mxu0 0
        %1142 = vmatprep.subr.bf16.mxu0 0
        %1143 = vmatpush1.bf16.msra.mxu0 0
        %1144 = vmatprep.subr.bf16.mxu0 0
        %1145 = vmatpush1.bf16.msra.mxu0 0
        %1146 = vmatprep.mubr.bf16.mxu0 0
        %1147 = vmatmul.mubr.bf16.gmra.mrb[0].mxu0 %v1087
        %v1148 = vpop.f32.mrb[0].mxu0
        %v1149 = vadd.f32 %v1056, %v1148
        %v1150 = vpop.f32.mrb[0].mxu0
        %v1151 = vpop.f32.mrb[0].mxu0
        %v1152 = vadd.f32 %v1056, %v1151
        %v1153 = vpop.f32.mrb[0].mxu0
        %1154 = vmatprep.mubr.bf16.mxu0 0
        %1155 = vmatmul.mubr.bf16.gmra.mrb[0].mxu0 %v1090
        %v1156 = vpop.f32.mrb[0].mxu0
        %v1157 = vadd.f32 %v1056, %v1156
        %v1158 = vpop.f32.mrb[0].mxu0
        %v1159 = vpop.f32.mrb[0].mxu0
        %v1160 = vadd.f32 %v1056, %v1159
        %v1161 = vpop.f32.mrb[0].mxu0
        %1162 = vmatprep.mubr.bf16.mxu0 0
        %1163 = vmatmul.mubr.bf16.gmra.mrb[0].mxu0 %v1093
        %v1164 = vpop.f32.mrb[0].mxu0
        %v1165 = vadd.f32 %v1056, %v1164
        %v1166 = vpop.f32.mrb[0].mxu0
        %v1167 = vpop.f32.mrb[0].mxu0
        %v1168 = vadd.f32 %v1056, %v1167
        %v1169 = vpop.f32.mrb[0].mxu0
        %1170 = vmatprep.mubr.bf16.mxu0 0
        %1171 = vmatmul.mubr.bf16.gmra.mrb[0].mxu0 %v1096
        %v1172 = vpop.f32.mrb[0].mxu0
        %v1173 = vadd.f32 %v1056, %v1172
        %v1174 = vpop.f32.mrb[0].mxu0
        %v1175 = vpop.f32.mrb[0].mxu0
        %v1176 = vadd.f32 %v1056, %v1175
        %v1177 = vpop.f32.mrb[0].mxu0
        %1178 = vmatprep.mubr.bf16.mxu0 0
        %1179 = vmatmul.mubr.bf16.gmra.mrb[0].mxu0 %v1099
        %v1180 = vpop.f32.mrb[0].mxu0
        %v1181 = vadd.f32 %v1056, %v1180
        %v1182 = vpop.f32.mrb[0].mxu0
        %v1183 = vpop.f32.mrb[0].mxu0
        %v1184 = vadd.f32 %v1056, %v1183
        %v1185 = vpop.f32.mrb[0].mxu0
        %1186 = vmatprep.mubr.bf16.mxu0 0
        %1187 = vmatmul.mubr.bf16.gmra.mrb[0].mxu0 %v1102
        %v1188 = vpop.f32.mrb[0].mxu0
        %v1189 = vadd.f32 %v1056, %v1188
        %v1190 = vpop.f32.mrb[0].mxu0
        %v1191 = vpop.f32.mrb[0].mxu0
        %v1192 = vadd.f32 %v1056, %v1191
        %v1193 = vpop.f32.mrb[0].mxu0
        %1194 = vmatprep.mubr.bf16.mxu0 0
        %1195 = vmatmul.mubr.bf16.gmra.mrb[0].mxu0 %v1105
        %v1196 = vpop.f32.mrb[0].mxu0
        %v1197 = vadd.f32 %v1056, %v1196
        %v1198 = vpop.f32.mrb[0].mxu0
        %v1199 = vpop.f32.mrb[0].mxu0
        %v1200 = vadd.f32 %v1056, %v1199
        %v1201 = vpop.f32.mrb[0].mxu0
        %1202 = vmatprep.mubr.bf16.mxu0 0
        %1203 = vmatmul.mubr.bf16.gmra.mrb[0].mxu0 %v1108
        %v1204 = vpop.f32.mrb[0].mxu0
        %v1205 = vadd.f32 %v1056, %v1204
        %v1206 = vpop.f32.mrb[0].mxu0
        %v1207 = vpop.f32.mrb[0].mxu0
        %v1208 = vadd.f32 %v1056, %v1207
        %v1209 = vpop.f32.mrb[0].mxu0
        %1210 = vdwg.mxu0
        %1211 = vst [vmem:[%s214] sm:$0xff] %v1149
        %1212 = vst [vmem:[%s214 + $0x8] sm:$0xff] %v1152
        %1213 = vst [vmem:[%s214 + $0x10] sm:$0xff] %v1157
        %1214 = vst [vmem:[%s214 + $0x18] sm:$0xff] %v1160
        %1215 = vst [vmem:[%s214 + $0x20] sm:$0xff] %v1165
        %1216 = vst [vmem:[%s214 + $0x28] sm:$0xff] %v1168
        %1217 = vst [vmem:[%s214 + $0x30] sm:$0xff] %v1173
        %1218 = vst [vmem:[%s214 + $0x38] sm:$0xff] %v1176
        %1219 = vst [vmem:[%s214 + $0x40] sm:$0xff] %v1181
        %1220 = vst [vmem:[%s214 + $0x48] sm:$0xff] %v1184
        %1221 = vst [vmem:[%s214 + $0x50] sm:$0xff] %v1189
        %1222 = vst [vmem:[%s214 + $0x58] sm:$0xff] %v1192
        %1223 = vst [vmem:[%s214 + $0x60] sm:$0xff] %v1197
        %1224 = vst [vmem:[%s214 + $0x68] sm:$0xff] %v1200
        %1225 = vst [vmem:[%s214 + $0x70] sm:$0xff] %v1205
        %1226 = vst [vmem:[%s214 + $0x78] sm:$0xff] %v1208
        %v1227 = vadd.f32 %v1149, %v1152
        %v1228 = vadd.f32 %v1227, %v1157
        %v1229 = vadd.f32 %v1228, %v1160
        %v1230 = vadd.f32 %v1229, %v1165
        %v1231 = vadd.f32 %v1230, %v1168
        %v1232 = vadd.f32 %v1231, %v1173
        %v1233 = vadd.f32 %v1232, %v1176
        %v1234 = vadd.f32 %v1233, %v1181
        %v1235 = vadd.f32 %v1234, %v1184
        %v1236 = vadd.f32 %v1235, %v1189
        %v1237 = vadd.f32 %v1236, %v1192
        %v1238 = vadd.f32 %v1237, %v1197
        %v1239 = vadd.f32 %v1238, %v1200
        %v1240 = vadd.f32 %v1239, %v1205
        %v1241 = vadd.f32 %v1240, %v1208
        %v1242 = vrot.slane %v1241, 4
        %v1243 = vadd.f32 %v1241, %v1242
        %v1244 = vrot.slane %v1243, 2
        %v1245 = vadd.f32 %v1243, %v1244
        %v1246 = vrot.slane %v1245, 1
        %v1247 = vadd.f32 %v1245, %v1246
        %v1248 = vmul.f32 %v1149, %v1149
        %v1249 = vmul.f32 %v1152, %v1152
        %v1250 = vmul.f32 %v1157, %v1157
        %v1251 = vmul.f32 %v1160, %v1160
        %v1252 = vmul.f32 %v1165, %v1165
        %v1253 = vmul.f32 %v1168, %v1168
        %v1254 = vmul.f32 %v1173, %v1173
        %v1255 = vmul.f32 %v1176, %v1176
        %v1256 = vmul.f32 %v1181, %v1181
        %v1257 = vmul.f32 %v1184, %v1184
        %v1258 = vmul.f32 %v1189, %v1189
        %v1259 = vmul.f32 %v1192, %v1192
        %v1260 = vmul.f32 %v1197, %v1197
        %v1261 = vmul.f32 %v1200, %v1200
        %v1262 = vmul.f32 %v1205, %v1205
        %v1263 = vmul.f32 %v1208, %v1208
        %v1264 = vadd.f32 %v1248, %v1249
        %v1265 = vadd.f32 %v1264, %v1250
        %v1266 = vadd.f32 %v1265, %v1251
        %v1267 = vadd.f32 %v1266, %v1252
        %v1268 = vadd.f32 %v1267, %v1253
        %v1269 = vadd.f32 %v1268, %v1254
        %v1270 = vadd.f32 %v1269, %v1255
        %v1271 = vadd.f32 %v1270, %v1256
        %v1272 = vadd.f32 %v1271, %v1257
        %v1273 = vadd.f32 %v1272, %v1258
        %v1274 = vadd.f32 %v1273, %v1259
        %v1275 = vadd.f32 %v1274, %v1260
        %v1276 = vadd.f32 %v1275, %v1261
        %v1277 = vadd.f32 %v1276, %v1262
        %v1278 = vadd.f32 %v1277, %v1263
        %v1279 = vrot.slane %v1278, 4
        %v1280 = vadd.f32 %v1278, %v1279
        %v1281 = vrot.slane %v1280, 2
        %v1282 = vadd.f32 %v1280, %v1281
        %v1283 = vrot.slane %v1282, 1
        %v1284 = vadd.f32 %v1282, %v1283
        %vm1285 = vcmask 1040384
        %v1286 = vsel %vm1285, %v1247, %v1284
        %vm1287 = vcmask 1041408
        %v1288 = vsel %vm1287, %v1286, 0.0
        %1289 = vst [vmem:[%s221] sm:$0xff] %v1288
        %s1290 = sand.u32 %s114, 1
        %s1291 = scalar_lea.sflag [#allocation3], %s1290
        %s1292 = sand.u32 %s114, 1
        %s1293 = smul.addr %s1292, 128
        %s1294 = scalar_lea.vmem [#allocation2], %s1293
        %s1295 = sand.u32 %s144, 1
        %s1296 = scalar_lea.sflag [#allocation5], %s1295
        %s1297 = sand.u32 %s144, 1
        %s1298 = smul.addr %s1297, 8
        %s1299 = scalar_lea.vmem [#allocation4], %s1298
        // Predicated region
        $region33: #{tpu_custom_call.1} parent=31 // pred_check
          %p1300 = pneg %p124
        $region34: #{tpu_custom_call.1} parent=31 // pred_check_branch
          %1302 = sbr.rel (%p1300) target = $region36
        $region35: #{tpu_custom_call.1} parent=31 // pred_region
          %s1303 = smul.u32 %s26, 2
          %s1304 = sadd.s32 %s1303, %s27
          %s1305 = smul.u32 16, %s1304
          %s1307 = ssub.s32 2048, 2048
          %1308 = vsyncadd %s1291, %s1307
          %s1309 = smul.addr %s1305, 128
          %s1310 = scalar_lea.hbm %s3, %s1309
          %s1311 = sshll.u32 %s1294, 4
          %s1312 = int_to_ptr.vmem [resolvable:$true] %s1311
          %1317 = dma.vmem_to_hbm [thread:$0]  %s1312, 2048, %s1310, %s1291, 128, 128, 8
        $region36: #{tpu_custom_call.1} parent=31 // pred_fallthru
          _
        // Predicated region
        $region37: #{tpu_custom_call.1} parent=31 // pred_check
          %p1318 = pneg %p154
        $region38: #{tpu_custom_call.1} parent=31 // pred_check_branch
          %1320 = sbr.rel (%p1318) target = $region40
        $region39: #{tpu_custom_call.1} parent=31 // pred_region
          %s1321 = smul.u32 %s26, 2
          %s1322 = sadd.s32 %s1321, %s27
          %s1324 = ssub.s32 128, 128
          %1325 = vsyncadd %s1296, %s1324
          %s1326 = smul.addr %s1322, 128
          %s1327 = scalar_lea.hbm %s4, %s1326
          %s1329 = sshll.u32 %s1299, 4
          %s1330 = int_to_ptr.vmem [resolvable:$true] %s1329
          %1332 = dma.vmem_to_hbm [thread:$0]  %s1330, 128, %s1327, %s1296
        $region40: #{tpu_custom_call.1} parent=31 // pred_fallthru
          _
      $region32: #{tpu_custom_call.1} parent=5 // pred_fallthru
        _
      %p1333 = scmp.le.s32.totalorder 2, %s17
      // Predicated region
      $region41: #{tpu_custom_call.1} parent=5 // pred_check
        %p1334 = pneg %p1333
      $region42: #{tpu_custom_call.1} parent=5 // pred_check_branch
        %1336 = sbr.rel (%p1334) target = $region44
      $region43: #{tpu_custom_call.1} parent=5 // pred_region
        %s1337 = ssub.s32 %s17, 2
        // Predicated region
        $region45: #{tpu_custom_call.1} parent=43 // pred_check
          %p1338 = pneg %p130
        $region46: #{tpu_custom_call.1} parent=43 // pred_check_branch
          %1340 = sbr.rel (%p1338) target = $region48
        $region47: #{tpu_custom_call.1} parent=43 // pred_region
          %s1341 = sand.u32 %s115, 1
          %s1342 = scalar_lea.sflag [#allocation3], %s1341
          %s1343 = sand.u32 %s115, 1
          %s1344 = smul.addr %s1343, 128
          %s1345 = scalar_lea.vmem [#allocation2], %s1344
          %1346 = dma.done %s1342, 2048
        $region48: #{tpu_custom_call.1} parent=43 // pred_fallthru
          _
        // Predicated region
        $region49: #{tpu_custom_call.1} parent=43 // pred_check
          %p1347 = pneg %p160
        $region50: #{tpu_custom_call.1} parent=43 // pred_check_branch
          %1349 = sbr.rel (%p1347) target = $region52
        $region51: #{tpu_custom_call.1} parent=43 // pred_region
          %s1350 = sand.u32 %s145, 1
          %s1351 = scalar_lea.sflag [#allocation5], %s1350
          %s1352 = sand.u32 %s145, 1
          %s1353 = smul.addr %s1352, 8
          %s1354 = scalar_lea.vmem [#allocation4], %s1353
          %1355 = dma.done %s1351, 128
        $region52: #{tpu_custom_call.1} parent=43 // pred_fallthru
          _
      $region44: #{tpu_custom_call.1} parent=5 // pred_fallthru
        _
    $region6: #{tpu_custom_call.1} parent=1 // loop_footer
      %s21 = sadd.s32 1, %s17
    $region7: #{tpu_custom_call.1} parent=1 // loop_footer_branch
      %16 = sbr.rel target = $region3
    $region8: #{tpu_custom_call.1} parent=1 // loop_exit
      _
    %1356 = vsyncpa [#allocation3], 1
    %s1357 = scalar_lea.sflag [#allocation3], 1
    %1358 = vsyncpa %s1357, 1
    %1359 = vsyncpa [#allocation5], 1
    %s1360 = scalar_lea.sflag [#allocation5], 1
    %1361 = vsyncpa %s1360, 1

</llo_original>
